<compile_context>
chip_gen: v7x
topology: tpu7x:2x2x1
jax: 0.10.0
libtpu: 0.0.40
codegen_flags: <defaults>
</compile_context>

<pallas_src>
import functools

import jax
import jax.numpy as jnp
from jax import lax
from jax.experimental import pallas as pl
from jax.experimental.pallas import tpu as pltpu

BN_EPS = 1e-5


def _make_stgcn_kernel(Bb, T, T_out, VCout, stride, matmul_dtype):
  """Fused ST-GCN block kernel operating on `Bb` batch elements per grid step."""
  rows = Bb * T

  def kernel(x_ref,    # (Bb*T, V*Cin)      lane-dense (v, cin), pre-cast to matmul_dtype
             wgr_ref,  # (V*Cin, 2*V*Cout)  [kron(A^T,Wg^T) | kron(I_V,(rs*Wr)^T)]
             wt_ref,   # (V*Cout, 3*V*Cout) concat_k kron(I_V, (bns*Wt_k)^T)
             pv_ref,   # (2, V*Cout)        row0 = gcn bias (tiled over V), row1 = folded shift
             o_ref):   # (Bb, T_out, V*Cout) lane-dense output
    md = matmul_dtype

    # ---- (1) fused graph-mix+GCN conv AND residual conv: ONE matmul, N = 2*V*Cout ----
    gr = jnp.dot(x_ref[...], wgr_ref[...],
                 preferred_element_type=jnp.float32)              # (rows, 2*VCout) f32
    g = gr[:, :VCout] + pv_ref[0:1, :]                            # GCN output (+ bias)
    r = gr[:, VCout:]                                             # residual (BN scale folded)

    # ---- (2) temporal (3,1) conv: ONE matmul for all 3 taps (BN scale folded), then
    #          time shifts via XLU roll + boundary masks (no misaligned concats) ----
    y = jnp.dot(g.astype(md), wt_ref[...],
                preferred_element_type=jnp.float32)               # (rows, 3*VCout) f32
    y0 = y[:, 0 * VCout:1 * VCout]                                # tap k=0 -> wants g[t-1]
    y1 = y[:, 1 * VCout:2 * VCout]                                # tap k=1 -> g[t]
    y2 = y[:, 2 * VCout:3 * VCout]                                # tap k=2 -> wants g[t+1]

    t_in_seq = lax.broadcasted_iota(jnp.int32, (rows, VCout), 0) % T
    p0 = jnp.where(t_in_seq != 0,
                   pltpu.roll(y0, shift=1, axis=0), 0.0)          # g[t-1], zero at t==0
    p2 = jnp.where(t_in_seq != T - 1,
                   pltpu.roll(y2, shift=rows - 1, axis=0), 0.0)   # g[t+1], zero at t==T-1

    # ---- (3) add residual + single folded shift, ReLU; unmasked lane-dense store ----
    total = y1 + p0 + p2 + r + pv_ref[1:2, :]
    act = jnp.maximum(total, 0.0)

    if stride == 1:
      o_ref[...] = act.reshape(Bb, T_out, VCout).astype(o_ref.dtype)
    elif T % stride == 0:
      # contiguous reshape + static index instead of a strided sublane slice
      o_ref[...] = act.reshape(Bb, T_out, stride, VCout)[:, :, 0, :].astype(o_ref.dtype)
    else:
      # TODO(synk): strided sublane slice; rewrite with per-step slices if Mosaic rejects it.
      o_ref[...] = act.reshape(Bb, T, VCout)[:, ::stride, :].astype(o_ref.dtype)

  return kernel


def stgcn_block_forward(x_nchw, params, stride=1, *, batch_block=None,
                        matmul_dtype=jnp.bfloat16,
                        vmem_limit_bytes=32 * 1024 * 1024):
  """Pallas forward. x_nchw: (B, C_in, T, V) like the PyTorch module."""
  B, Cin, T, V = x_nchw.shape
  Cout = params["gcn_w"].shape[0]
  T_out = (T - 1) // stride + 1
  # On v7x set batch_block = B // 2 (or smaller) so the parallel batch axis splits across
  # the two TensorCores; on v5e/v6e keep one big block (fewest grid steps).
  Bb = B if batch_block is None else batch_block
  assert B % Bb == 0, "batch_block must divide B"
  VCin, VCout = V * Cin, V * Cout

  # boundary layout change (XLA side): NCHW -> lane-dense rows=(b,t), lanes=(v,c)
  xf = jnp.transpose(x_nchw, (0, 2, 3, 1)).astype(jnp.float32)    # (B, T, V, Cin)
  x_dense = xf.reshape(B * T, VCin).astype(matmul_dtype)          # pre-cast ONCE

  A = params["A"].astype(jnp.float32)
  eyeV = jnp.eye(V, dtype=jnp.float32)

  # main-path BN folded to per-channel scale/shift (eval mode)
  bns = params["bn_g"] / jnp.sqrt(params["bn_v"] + BN_EPS)
  bnb = params["bn_b"] - params["bn_m"] * bns

  # (1a) graph mix + GCN 1x1 conv fused: kron(A^T, Wg^T)
  wg = params["gcn_w"][:, :, 0, 0].astype(jnp.float32)            # (Cout, Cin)
  w1 = jnp.kron(A.T, wg.T)                                        # (VCin, VCout)

  # (1b) residual 1x1 conv with its BN scale folded into the weight
  if params.get("res_w") is not None:
    wr_c = params["res_w"][:, :, 0, 0].astype(jnp.float32)        # (Cout, Cin)
    br_c = params["res_b"].astype(jnp.float32)
    rs_c = params["res_bn_g"] / jnp.sqrt(params["res_bn_v"] + BN_EPS)
    rb_c = params["res_bn_b"] - params["res_bn_m"] * rs_c
  else:
    # identity residual (PyTorch uses nn.Identity when Cin==Cout and stride==1: no BN)
    wr_c = jnp.eye(Cout, dtype=jnp.float32)
    br_c = jnp.zeros((Cout,), jnp.float32)
    rs_c = jnp.ones((Cout,), jnp.float32)
    rb_c = jnp.zeros((Cout,), jnp.float32)
  wr = jnp.kron(eyeV, (wr_c * rs_c[:, None]).T)                   # (VCin, VCout)

  # fused GCN + residual weight: ONE matmul, N = 2*VCout
  wgr = jnp.concatenate([w1, wr], axis=1).astype(matmul_dtype)    # (VCin, 2*VCout)

  # temporal taps with the main BN scale folded in: concat_k kron(I_V, (bns*Wt_k)^T)
  wt = jnp.concatenate(
      [jnp.kron(eyeV, (params["tcn_w"][:, :, k, 0].astype(jnp.float32)
                       * bns[:, None]).T) for k in range(3)],
      axis=1).astype(matmul_dtype)                                 # (VCout, 3*VCout)

  # per-channel rows tiled over V, folded to 2 rows:
  #   row 0: GCN bias (added to g before the temporal matmul)
  #   row 1: everything else: bt*bns + bnb + br*rs + rb
  bg_row = jnp.tile(params["gcn_b"].astype(jnp.float32), V)
  shift_row = jnp.tile((params["tcn_b"] * bns + bnb
                        + br_c * rs_c + rb_c).astype(jnp.float32), V)
  pv = jnp.stack([bg_row, shift_row], axis=0)                      # (2, VCout)

  kernel = _make_stgcn_kernel(Bb, T, T_out, VCout, stride, matmul_dtype)

  out = pl.pallas_call(
      kernel,
      out_shape=jax.ShapeDtypeStruct((B, T_out, VCout), jnp.float32),
      grid_spec=pltpu.PrefetchScalarGridSpec(
          num_scalar_prefetch=0,
          grid=(B // Bb,),
          in_specs=[
              pl.BlockSpec((Bb * T, VCin), lambda b: (b, 0)),
              pl.BlockSpec((VCin, 2 * VCout), lambda b: (0, 0)),
              pl.BlockSpec((VCout, 3 * VCout), lambda b: (0, 0)),
              pl.BlockSpec((2, VCout), lambda b: (0, 0)),
          ],
          out_specs=pl.BlockSpec((Bb, T_out, VCout), lambda b: (b, 0, 0)),
      ),
      compiler_params=pltpu.CompilerParams(
          dimension_semantics=("parallel",),
          vmem_limit_bytes=vmem_limit_bytes),
  )(x_dense, wgr, wt, pv)

  # lane-dense (B, T_out, V*Cout) -> NCHW (B, Cout, T_out, V)
  return jnp.transpose(out.reshape(B, T_out, V, Cout), (0, 3, 1, 2))


def ref_forward(x, p, stride=1):
  """Pure-JAX reference matching the PyTorch forward (eval-mode BN)."""
  y = jnp.einsum("vu,bctu->bctv", p["A"], x)
  g = jnp.einsum("oc,bctv->botv", p["gcn_w"][:, :, 0, 0], y) \
      + p["gcn_b"][None, :, None, None]
  B, Co, T, V = g.shape
  T_out = (T - 1) // stride + 1
  gp = jnp.pad(g, ((0, 0), (0, 0), (1, 1), (0, 0)))
  tc = jnp.zeros((B, Co, T_out, V), jnp.float32) + p["tcn_b"][None, :, None, None]
  for k in range(3):
    sl = gp[:, :, k: k + stride * (T_out - 1) + 1: stride, :]
    tc = tc + jnp.einsum("oc,bctv->botv", p["tcn_w"][:, :, k, 0], sl)
  scale = p["bn_g"] / jnp.sqrt(p["bn_v"] + BN_EPS)
  tc = (tc - p["bn_m"][None, :, None, None]) * scale[None, :, None, None] \
      + p["bn_b"][None, :, None, None]
  xs = x[:, :, ::stride, :]
  r = jnp.einsum("oc,bctv->botv", p["res_w"][:, :, 0, 0], xs) \
      + p["res_b"][None, :, None, None]
  rscale = p["res_bn_g"] / jnp.sqrt(p["res_bn_v"] + BN_EPS)
  r = (r - p["res_bn_m"][None, :, None, None]) * rscale[None, :, None, None] \
      + p["res_bn_b"][None, :, None, None]
  return jnp.maximum(tc + r, 0.0)


def init_params(key, in_channels, out_channels, V):
  ks = jax.random.split(key, 12)
  p = {
      "A": jax.random.normal(ks[0], (V, V), jnp.float32) * 0.3,
      "gcn_w": jax.random.normal(ks[1], (out_channels, in_channels, 1, 1), jnp.float32) * 0.2,
      "gcn_b": jax.random.normal(ks[2], (out_channels,), jnp.float32) * 0.1,
      "tcn_w": jax.random.normal(ks[3], (out_channels, out_channels, 3, 1), jnp.float32) * 0.2,
      "tcn_b": jax.random.normal(ks[4], (out_channels,), jnp.float32) * 0.1,
      "bn_g": 1.0 + 0.1 * jax.random.normal(ks[5], (out_channels,), jnp.float32),
      "bn_b": 0.1 * jax.random.normal(ks[6], (out_channels,), jnp.float32),
      "bn_m": 0.1 * jax.random.normal(ks[7], (out_channels,), jnp.float32),
      "bn_v": 0.5 + jnp.abs(jax.random.normal(ks[8], (out_channels,), jnp.float32)) * 0.5,
      # residual branch (in_channels != out_channels or stride != 1)
      "res_w": jax.random.normal(ks[9], (out_channels, in_channels, 1, 1), jnp.float32) * 0.2,
      "res_b": jax.random.normal(ks[10], (out_channels,), jnp.float32) * 0.1,
      "res_bn_g": jnp.ones((out_channels,), jnp.float32) * 0.9,
      "res_bn_b": jnp.ones((out_channels,), jnp.float32) * 0.05,
      "res_bn_m": jnp.zeros((out_channels,), jnp.float32) + 0.02,
      "res_bn_v": jnp.ones((out_channels,), jnp.float32) * 0.8,
  }
  p["res_bn_v"] = p["res_bn_v"] + 0.1 * jnp.abs(
      jax.random.normal(ks[11], (out_channels,), jnp.float32))
  return p


if __name__ == "__main__":
  B, Cin, Cout, T, V = 2, 4, 8, 16, 16   # x: (2, 4, 16, 16); V*Cout = 128 -> lane-dense
  stride = 1

  key = jax.random.PRNGKey(0)
  kx, kp = jax.random.split(key)
  x = jax.random.normal(kx, (B, Cin, T, V), jnp.float32)   # NCHW: (B, C_in, T, V)
  params = init_params(kp, Cin, Cout, V)

  ref = jax.block_until_ready(ref_forward(x, params, stride=stride))

  # Default bf16 MXU path (f32 accumulation): validated with a bf16-appropriate tolerance.
  fwd_bf16 = jax.jit(functools.partial(stgcn_block_forward, stride=stride))
  out_bf16 = jax.block_until_ready(fwd_bf16(x, params))
  assert out_bf16.shape == ref.shape == (B, Cout, (T - 1) // stride + 1, V), \
      (out_bf16.shape, ref.shape)
  err_bf16 = float(jnp.max(jnp.abs(out_bf16 - ref)))
  assert err_bf16 < 1e-1, f"bf16 path max abs error too large: {err_bf16}"

  # f32 MXU path: tight check of the fused/folded math against the reference.
  fwd_f32 = jax.jit(functools.partial(stgcn_block_forward, stride=stride,
                                      matmul_dtype=jnp.float32))
  out_f32 = jax.block_until_ready(fwd_f32(x, params))
  err_f32 = float(jnp.max(jnp.abs(out_f32 - ref)))
  assert err_f32 < 1e-2, f"f32 path max abs error too large: {err_f32}"

  print("KERNEL_OK")
</pallas_src>

<mosaic_0001>
module attributes {stable_mosaic.version = 11 : i64} {
  func.func @kernel(%arg0: i32, %arg1: memref<32x64xbf16, #tpu.memory_space<vmem>>, %arg2: memref<64x256xbf16, #tpu.memory_space<vmem>>, %arg3: memref<128x384xbf16, #tpu.memory_space<vmem>>, %arg4: memref<2x128xf32, #tpu.memory_space<vmem>>, %arg5: memref<2x16x128xf32, #tpu.memory_space<vmem>>) attributes {dimension_semantics = [#tpu.dimension_semantics<parallel>], iteration_bounds = array<i64: 1>, scalar_prefetch = 0 : i64, scratch_operands = 0 : i64, tpu.core_type = #tpu.core_type<tc>, window_params = [{transform_indices = @transform_0, window_bounds = array<i64: 32, 64>}, {pipeline_mode = #tpu.pipeline_mode<synchronous>, transform_indices = @transform_1, window_bounds = array<i64: 64, 256>}, {pipeline_mode = #tpu.pipeline_mode<synchronous>, transform_indices = @transform_2, window_bounds = array<i64: 128, 384>}, {pipeline_mode = #tpu.pipeline_mode<synchronous>, transform_indices = @transform_3, window_bounds = array<i64: 2, 128>}, {transform_indices = @transform_4, window_bounds = array<i64: 2, 16, 128>}]} {
    %c0 = arith.constant 0 : index
    %c0_0 = arith.constant 0 : index
    %0 = vector.load %arg1[%c0, %c0_0] : memref<32x64xbf16, #tpu.memory_space<vmem>>, vector<32x64xbf16>
    %c0_1 = arith.constant 0 : index
    %c0_2 = arith.constant 0 : index
    %1 = vector.load %arg2[%c0_1, %c0_2] : memref<64x256xbf16, #tpu.memory_space<vmem>>, vector<64x256xbf16>
    %cst = arith.constant dense<0.000000e+00> : vector<32x256xf32>
    %2 = tpu.matmul %0, %1, %cst {dimension_numbers = #tpu.dot_dimension_numbers<[1], [0], [0], [1], [0, 0, 1, 1], [], []>} : vector<32x64xbf16>, vector<64x256xbf16>, vector<32x256xf32> -> vector<32x256xf32>
    %3 = vector.extract_strided_slice %2 {offsets = [0, 0], sizes = [32, 128], strides = [1, 1]} : vector<32x256xf32> to vector<32x128xf32>
    %c0_3 = arith.constant 0 : index
    %c0_4 = arith.constant 0 : index
    %4 = vector.load %arg4[%c0_3, %c0_4] : memref<2x128xf32, #tpu.memory_space<vmem>>, vector<1x128xf32>
    %5 = vector.broadcast %4 : vector<1x128xf32> to vector<32x128xf32>
    %6 = arith.addf %3, %5 : vector<32x128xf32>
    %7 = vector.extract_strided_slice %2 {offsets = [0, 128], sizes = [32, 128], strides = [1, 1]} : vector<32x256xf32> to vector<32x128xf32>
    %8 = arith.truncf %6 : vector<32x128xf32> to vector<32x128xbf16>
    %c0_5 = arith.constant 0 : index
    %c0_6 = arith.constant 0 : index
    %9 = vector.load %arg3[%c0_5, %c0_6] : memref<128x384xbf16, #tpu.memory_space<vmem>>, vector<128x384xbf16>
    %cst_7 = arith.constant dense<0.000000e+00> : vector<32x384xf32>
    %10 = tpu.matmul %8, %9, %cst_7 {dimension_numbers = #tpu.dot_dimension_numbers<[1], [0], [0], [1], [0, 0, 1, 1], [], []>} : vector<32x128xbf16>, vector<128x384xbf16>, vector<32x384xf32> -> vector<32x384xf32>
    %11 = vector.extract_strided_slice %10 {offsets = [0, 0], sizes = [32, 128], strides = [1, 1]} : vector<32x384xf32> to vector<32x128xf32>
    %12 = vector.extract_strided_slice %10 {offsets = [0, 128], sizes = [32, 128], strides = [1, 1]} : vector<32x384xf32> to vector<32x128xf32>
    %13 = vector.extract_strided_slice %10 {offsets = [0, 256], sizes = [32, 128], strides = [1, 1]} : vector<32x384xf32> to vector<32x128xf32>
    %14 = tpu.iota {dimensions = array<i32: 0>} : vector<32x128xi32>
    %c16_i32 = arith.constant 16 : i32
    %c0_i32 = arith.constant 0 : i32
    %15 = arith.cmpi eq, %c16_i32, %c0_i32 : i32
    %c1_i32 = arith.constant 1 : i32
    %16 = arith.select %15, %c1_i32, %c16_i32 : i32
    %17 = vector.broadcast %16 : i32 to vector<32x128xi32>
    %18 = arith.remsi %14, %17 : vector<32x128xi32>
    %c0_i32_8 = arith.constant 0 : i32
    %19 = vector.broadcast %c0_i32_8 : i32 to vector<32x128xi32>
    %20 = arith.cmpi ne, %18, %19 : vector<32x128xi32>
    %c0_i32_9 = arith.constant 0 : i32
    %21 = vector.broadcast %c0_i32_9 : i32 to vector<32x128xi32>
    %22 = arith.cmpi slt, %18, %21 : vector<32x128xi32>
    %c0_i32_10 = arith.constant 0 : i32
    %23 = arith.cmpi slt, %16, %c0_i32_10 : i32
    %24 = vector.broadcast %23 : i1 to vector<32x128xi1>
    %25 = vector.broadcast %24 : vector<32x128xi1> to vector<32x128xi1>
    %26 = arith.xori %22, %25 : vector<32x128xi1>
    %27 = arith.andi %26, %20 : vector<32x128xi1>
    %28 = vector.broadcast %16 : i32 to vector<32x128xi32>
    %29 = arith.addi %18, %28 : vector<32x128xi32>
    %30 = arith.select %27, %29, %18 : vector<32x128xi1>, vector<32x128xi32>
    %c0_i32_11 = arith.constant 0 : i32
    %31 = vector.broadcast %c0_i32_11 : i32 to vector<32x128xi32>
    %32 = arith.cmpi ne, %30, %31 : vector<32x128xi32>
    %c1_i32_12 = arith.constant 1 : i32
    %33 = tpu.dynamic_rotate %11 by %c1_i32_12 dim 0 : vector<32x128xf32>, i32 -> vector<32x128xf32>
    %cst_13 = arith.constant 0.000000e+00 : f32
    %34 = vector.broadcast %cst_13 : f32 to vector<32x128xf32>
    %35 = arith.select %32, %33, %34 : vector<32x128xi1>, vector<32x128xf32>
    %c15_i32 = arith.constant 15 : i32
    %36 = vector.broadcast %c15_i32 : i32 to vector<32x128xi32>
    %37 = arith.cmpi ne, %30, %36 : vector<32x128xi32>
    %c31_i32 = arith.constant 31 : i32
    %38 = tpu.dynamic_rotate %13 by %c31_i32 dim 0 : vector<32x128xf32>, i32 -> vector<32x128xf32>
    %cst_14 = arith.constant 0.000000e+00 : f32
    %39 = vector.broadcast %cst_14 : f32 to vector<32x128xf32>
    %40 = arith.select %37, %38, %39 : vector<32x128xi1>, vector<32x128xf32>
    %41 = arith.addf %12, %35 : vector<32x128xf32>
    %42 = arith.addf %41, %40 : vector<32x128xf32>
    %43 = arith.addf %42, %7 : vector<32x128xf32>
    %c1 = arith.constant 1 : index
    %c0_15 = arith.constant 0 : index
    %44 = vector.load %arg4[%c1, %c0_15] : memref<2x128xf32, #tpu.memory_space<vmem>>, vector<1x128xf32>
    %45 = vector.broadcast %44 : vector<1x128xf32> to vector<32x128xf32>
    %46 = arith.addf %43, %45 : vector<32x128xf32>
    %cst_16 = arith.constant 0.000000e+00 : f32
    %47 = vector.broadcast %cst_16 : f32 to vector<32x128xf32>
    %48 = arith.maximumf %46, %47 : vector<32x128xf32>
    %49 = vector.shape_cast %48 : vector<32x128xf32> to vector<2x16x128xf32>
    %c0_17 = arith.constant 0 : index
    %c0_18 = arith.constant 0 : index
    %c0_19 = arith.constant 0 : index
    %50 = vector.load %arg5[%c0_17, %c0_18, %c0_19] : memref<2x16x128xf32, #tpu.memory_space<vmem>>, vector<2x16x128xf32>
    tpu.vector_store %arg5[%c0_17, %c0_18, %c0_19], %49 {strides = array<i32>} : memref<2x16x128xf32, #tpu.memory_space<vmem>>, vector<2x16x128xf32>,
    return
  }
  func.func @transform_0(%arg0: i32) -> (i32, i32) {
    %c0_i32 = arith.constant 0 : i32
    %c0_i32_0 = arith.constant 0 : i32
    return %arg0, %c0_i32 : i32, i32
  }
  func.func @transform_1(%arg0: i32) -> (i32, i32) {
    %c0_i32 = arith.constant 0 : i32
    %c0_i32_0 = arith.constant 0 : i32
    %c0_i32_1 = arith.constant 0 : i32
    return %c0_i32, %c0_i32_0 : i32, i32
  }
  func.func @transform_2(%arg0: i32) -> (i32, i32) {
    %c0_i32 = arith.constant 0 : i32
    %c0_i32_0 = arith.constant 0 : i32
    %c0_i32_1 = arith.constant 0 : i32
    return %c0_i32, %c0_i32_0 : i32, i32
  }
  func.func @transform_3(%arg0: i32) -> (i32, i32) {
    %c0_i32 = arith.constant 0 : i32
    %c0_i32_0 = arith.constant 0 : i32
    %c0_i32_1 = arith.constant 0 : i32
    return %c0_i32, %c0_i32_0 : i32, i32
  }
  func.func @transform_4(%arg0: i32) -> (i32, i32, i32) {
    %c0_i32 = arith.constant 0 : i32
    %c0_i32_0 = arith.constant 0 : i32
    %c0_i32_1 = arith.constant 0 : i32
    return %arg0, %c0_i32, %c0_i32_0 : i32, i32, i32
  }
}

</mosaic_0001>

<llo_original>
// kernel: tile.17
$region0: #{tile.17}
  #allocation0 [shape = 's32[1]{0}', space=sflag, size = 0x4, scoped, tag = 'scoped memory for tile.17']
  %s0 = inlined_call_operand.vmem [shape: f32[8], index: 0, kind: input, shape index: {}]
  %s1 = inlined_call_operand.vmem [shape: f32[16,8], index: 1, kind: output, shape index: {}]
  // Predicated region
  $region2: #{tile.17} parent=0 // pred_check
    _
  $region3: #{tile.17} parent=0 // pred_check_branch
    %3 = sbr.rel (0) target = $region5
  $region4: #{tile.17} parent=0 // pred_region
    _
  $region5: #{tile.17} parent=0 // pred_fallthru
    _
  %v4 = vld [vmem:[%s0] ss:$0 sm:$0xff]
  %5 = vst [vmem:[%s1] sm:$0xff] %v4
  %s6 = scalar_lea.vmem %s1, 8
  %7 = vst [vmem:[%s6] sm:$0xff] %v4

// kernel: tile.19
$region0: #{tile.19}
  %s0 = inlined_call_operand.vmem [shape: f32[16,8], index: 0, kind: input, shape index: {}]
  %s1 = inlined_call_operand.vmem [shape: f32[1,128], index: 1, kind: output, shape index: {}]
  $region1: #{tile.19} parent=0
    #allocation0 [shape = 'u8[4096]{0}', space=vmem, size = 0x1000, scoped, tag = 'scoped mem for output reshape']
    %v2 = vld [vmem:[%s0] sm:$0x1]
    %vm3 = vcmask 64512
    %4 = vst.msk [vmem:[#allocation0] sm:$0x1] %vm3, %v2
    %s5 = scalar_lea.vmem %s0, 15
    %v6 = vld [vmem:[%s5] sm:$0x1]
    %7 = vrot.lane.b32.xlu0 %v6, 120
    %v8 = vpop.permute.xlu0 %7
    %vm9 = vcmask 1048512
    %10 = vst.msk [vmem:[#allocation0] sm:$0x1] %vm9, %v8
    %s11 = scalar_lea.vmem %s0, 14
    %v12 = vld [vmem:[%s11] sm:$0x1]
    %13 = vrot.lane.b32.xlu0 %v12, 112
    %v14 = vpop.permute.xlu0 %13
    %vm15 = vcmask 982912
    %16 = vst.msk [vmem:[#allocation0] sm:$0x1] %vm15, %v14
    %s17 = scalar_lea.vmem %s0, 13
    %v18 = vld [vmem:[%s17] sm:$0x1]
    %19 = vrot.lane.b32.xlu0 %v18, 104
    %v20 = vpop.permute.xlu0 %19
    %vm21 = vcmask 917312
    %22 = vst.msk [vmem:[#allocation0] sm:$0x1] %vm21, %v20
    %s23 = scalar_lea.vmem %s0, 12
    %v24 = vld [vmem:[%s23] sm:$0x1]
    %25 = vrot.lane.b32.xlu0 %v24, 96
    %v26 = vpop.permute.xlu0 %25
    %vm27 = vcmask 851712
    %28 = vst.msk [vmem:[#allocation0] sm:$0x1] %vm27, %v26
    %s29 = scalar_lea.vmem %s0, 11
    %v30 = vld [vmem:[%s29] sm:$0x1]
    %31 = vrot.lane.b32.xlu0 %v30, 88
    %v32 = vpop.permute.xlu0 %31
    %vm33 = vcmask 786112
    %34 = vst.msk [vmem:[#allocation0] sm:$0x1] %vm33, %v32
    %s35 = scalar_lea.vmem %s0, 10
    %v36 = vld [vmem:[%s35] sm:$0x1]
    %37 = vrot.lane.b32.xlu0 %v36, 80
    %v38 = vpop.permute.xlu0 %37
    %vm39 = vcmask 720512
    %40 = vst.msk [vmem:[#allocation0] sm:$0x1] %vm39, %v38
    %s41 = scalar_lea.vmem %s0, 9
    %v42 = vld [vmem:[%s41] sm:$0x1]
    %43 = vrot.lane.b32.xlu0 %v42, 72
    %v44 = vpop.permute.xlu0 %43
    %vm45 = vcmask 654912
    %46 = vst.msk [vmem:[#allocation0] sm:$0x1] %vm45, %v44
    %s47 = scalar_lea.vmem %s0, 8
    %v48 = vld [vmem:[%s47] sm:$0x1]
    %49 = vrot.lane.b32.xlu0 %v48, 64
    %v50 = vpop.permute.xlu0 %49
    %vm51 = vcmask 589312
    %52 = vst.msk [vmem:[#allocation0] sm:$0x1] %vm51, %v50
    %s53 = scalar_lea.vmem %s0, 7
    %v54 = vld [vmem:[%s53] sm:$0x1]
    %55 = vrot.lane.b32.xlu0 %v54, 56
    %v56 = vpop.permute.xlu0 %55
    %vm57 = vcmask 523712
    %58 = vst.msk [vmem:[#allocation0] sm:$0x1] %vm57, %v56
    %s59 = scalar_lea.vmem %s0, 6
    %v60 = vld [vmem:[%s59] sm:$0x1]
    %61 = vrot.lane.b32.xlu0 %v60, 48
    %v62 = vpop.permute.xlu0 %61
    %vm63 = vcmask 458112
    %64 = vst.msk [vmem:[#allocation0] sm:$0x1] %vm63, %v62
    %s65 = scalar_lea.vmem %s0, 5
    %v66 = vld [vmem:[%s65] sm:$0x1]
    %67 = vrot.lane.b32.xlu0 %v66, 40
    %v68 = vpop.permute.xlu0 %67
    %vm69 = vcmask 392512
    %70 = vst.msk [vmem:[#allocation0] sm:$0x1] %vm69, %v68
    %s71 = scalar_lea.vmem %s0, 4
    %v72 = vld [vmem:[%s71] sm:$0x1]
    %73 = vrot.lane.b32.xlu0 %v72, 32
    %v74 = vpop.permute.xlu0 %73
    %vm75 = vcmask 326912
    %76 = vst.msk [vmem:[#allocation0] sm:$0x1] %vm75, %v74
    %s77 = scalar_lea.vmem %s0, 3
    %v78 = vld [vmem:[%s77] sm:$0x1]
    %79 = vrot.lane.b32.xlu0 %v78, 24
    %v80 = vpop.permute.xlu0 %79
    %vm81 = vcmask 261312
    %82 = vst.msk [vmem:[#allocation0] sm:$0x1] %vm81, %v80
    %s83 = scalar_lea.vmem %s0, 2
    %v84 = vld [vmem:[%s83] sm:$0x1]
    %85 = vrot.lane.b32.xlu0 %v84, 16
    %v86 = vpop.permute.xlu0 %85
    %vm87 = vcmask 195712
    %88 = vst.msk [vmem:[#allocation0] sm:$0x1] %vm87, %v86
    %s89 = scalar_lea.vmem %s0, 1
    %v90 = vld [vmem:[%s89] sm:$0x1]
    %91 = vrot.lane.b32.xlu0 %v90, 8
    %v92 = vpop.permute.xlu0 %91
    %vm93 = vcmask 130112
    %94 = vst.msk [vmem:[#allocation0] sm:$0x1] %vm93, %v92
    %s96 = sshllo.u32 0, 1
    %v98 = vld [vmem:[#allocation0] sm:%s96]
    %s99 = sshllo.u32 0, 1
    %100 = vst [vmem:[%s1] sm:%s99] %v98

// kernel: stgcn_block_forward.1
$region0: #{stgcn_block_forward.1}
  #allocation0 [shape = 'u32[]', space=smem, size = 0x4, offset = 0x4, fixed_abs, tag = 'smem constant byte address 0x4 - core index']
  #allocation1 [shape = 'u32[144,128]{1,0:T(1,128)}', space=vmem, size = 0x12000, scoped, tag = 'internal scratch']
  %s0 = inlined_call_operand.vmem [shape: bf16[32,64], index: 0, kind: input, shape index: {}]
  %s1 = inlined_call_operand.vmem [shape: bf16[64,256], index: 1, kind: input, shape index: {}]
  %s2 = inlined_call_operand.vmem [shape: bf16[128,384], index: 2, kind: input, shape index: {}]
  %s3 = inlined_call_operand.vmem [shape: f32[2,128], index: 3, kind: input, shape index: {}]
  %s4 = inlined_call_operand.vmem [shape: f32[2,16,128], index: 4, kind: output, shape index: {}]
  %s5 = sld [smem:[#allocation0]]
  $region26: #{stgcn_block_forward.1} parent=0
    _
  %s7 = ssub.s32 1, %s5
  %s8 = scalar_select 0, %s7, %s5
  // Predicated region
  $region2: #{stgcn_block_forward.1} parent=0 // pred_check
    _
  $region3: #{stgcn_block_forward.1} parent=0 // pred_check_branch
    %10 = sbr.rel (0) target = $region5
  $region4: #{stgcn_block_forward.1} parent=0 // pred_region
    _
  $region5: #{stgcn_block_forward.1} parent=0 // pred_fallthru
    _
  // Predicated region
  $region6: #{stgcn_block_forward.1} parent=0 // pred_check
    _
  $region7: #{stgcn_block_forward.1} parent=0 // pred_check_branch
    %12 = sbr.rel (0) target = $region9
  $region8: #{stgcn_block_forward.1} parent=0 // pred_region
    _
  $region9: #{stgcn_block_forward.1} parent=0 // pred_fallthru
    _
  // Predicated region
  $region10: #{stgcn_block_forward.1} parent=0 // pred_check
    _
  $region11: #{stgcn_block_forward.1} parent=0 // pred_check_branch
    %14 = sbr.rel (0) target = $region13
  $region12: #{stgcn_block_forward.1} parent=0 // pred_region
    _
  $region13: #{stgcn_block_forward.1} parent=0 // pred_fallthru
    _
  // Predicated region
  $region14: #{stgcn_block_forward.1} parent=0 // pred_check
    _
  $region15: #{stgcn_block_forward.1} parent=0 // pred_check_branch
    %16 = sbr.rel (0) target = $region17
  $region16: #{stgcn_block_forward.1} parent=0 // pred_region
    _
  $region17: #{stgcn_block_forward.1} parent=0 // pred_fallthru
    _
  %v18 = vld [vmem:[%s0] sm:$0xf]
  %v19 = vld [vmem:[%s0 + $0x4] sm:$0xf]
  %v20 = vld [vmem:[%s0 + $0x8] sm:$0xf]
  %v21 = vld [vmem:[%s0 + $0xc] sm:$0xf]
  %v22 = vld [vmem:[%s1] sm:$0xff]
  %v23 = vld [vmem:[%s1 + $0x8] sm:$0xff]
  %v24 = vld [vmem:[%s1 + $0x10] sm:$0xff]
  %v25 = vld [vmem:[%s1 + $0x18] sm:$0xff]
  %v26 = vld [vmem:[%s1 + $0x20] sm:$0xff]
  %v27 = vld [vmem:[%s1 + $0x28] sm:$0xff]
  %v28 = vld [vmem:[%s1 + $0x30] sm:$0xff]
  %v29 = vld [vmem:[%s1 + $0x38] sm:$0xff]
  %v34 = vunpack.c.l.b16 %v18
  %v35 = vunpack.c.l.b16 %v19
  %v36 = vunpack.c.l.b16 %v20
  %v37 = vunpack.c.l.b16 %v21
  %v38 = vpack.c.b16 %v35, %v34
  %v39 = vpack.c.b16 %v37, %v36
  %v48 = vunpack.c.l.b16 %v22
  %v49 = vunpack.c.h.b16 %v22
  %v50 = vunpack.c.l.b16 %v23
  %v51 = vunpack.c.h.b16 %v23
  %v52 = vunpack.c.l.b16 %v24
  %v53 = vunpack.c.h.b16 %v24
  %v54 = vunpack.c.l.b16 %v25
  %v55 = vunpack.c.h.b16 %v25
  %v56 = vunpack.c.l.b16 %v26
  %v57 = vunpack.c.h.b16 %v26
  %v58 = vunpack.c.l.b16 %v27
  %v59 = vunpack.c.h.b16 %v27
  %v60 = vunpack.c.l.b16 %v28
  %v61 = vunpack.c.h.b16 %v28
  %v62 = vunpack.c.l.b16 %v29
  %v63 = vunpack.c.h.b16 %v29
  %v64 = vpack.c.b16 %v50, %v48
  %v65 = vpack.c.b16 %v51, %v49
  %v66 = vpack.c.b16 %v54, %v52
  %v67 = vpack.c.b16 %v55, %v53
  %v68 = vpack.c.b16 %v58, %v56
  %v69 = vpack.c.b16 %v59, %v57
  %v70 = vpack.c.b16 %v62, %v60
  %v71 = vpack.c.b16 %v63, %v61
  %vm80 = vcmask 523264
  %v82 = vsel %vm80, %v38, 0
  %v85 = vsel %vm80, %v39, 0
  %87 = vmatprep.subr.bf16.mxu0 %v65
  %88 = vmatpush1.bf16.msra.mxu0 %v64
  %89 = vmatprep.subr.bf16.mxu0 %v67
  %90 = vmatpush1.bf16.msra.mxu0 %v66
  %91 = vmatprep.subr.bf16.mxu0 %v69
  %92 = vmatpush1.bf16.msra.mxu0 %v68
  %93 = vmatprep.subr.bf16.mxu0 %v71
  %94 = vmatpush1.bf16.msra.mxu0 %v70
  %95 = vmatprep.subr.bf16.mxu0 0
  %96 = vmatpush1.bf16.msra.mxu0 0
  %97 = vmatprep.subr.bf16.mxu0 0
  %98 = vmatpush1.bf16.msra.mxu0 0
  %99 = vmatprep.subr.bf16.mxu0 0
  %100 = vmatpush1.bf16.msra.mxu0 0
  %101 = vmatprep.subr.bf16.mxu0 0
  %102 = vmatpush1.bf16.msra.mxu0 0
  %103 = vmatprep.subr.bf16.mxu0 0
  %104 = vmatpush1.bf16.msra.mxu0 0
  %105 = vmatprep.subr.bf16.mxu0 0
  %106 = vmatpush1.bf16.msra.mxu0 0
  %107 = vmatprep.subr.bf16.mxu0 0
  %108 = vmatpush1.bf16.msra.mxu0 0
  %109 = vmatprep.subr.bf16.mxu0 0
  %110 = vmatpush1.bf16.msra.mxu0 0
  %111 = vmatprep.subr.bf16.mxu0 0
  %112 = vmatpush1.bf16.msra.mxu0 0
  %113 = vmatprep.subr.bf16.mxu0 0
  %114 = vmatpush1.bf16.msra.mxu0 0
  %115 = vmatprep.subr.bf16.mxu0 0
  %116 = vmatpush1.bf16.msra.mxu0 0
  %117 = vmatprep.subr.bf16.mxu0 0
  %118 = vmatpush1.bf16.msra.mxu0 0
  %119 = vmatprep.mubr.bf16.mxu0 0
  %120 = vmatmul.mubr.bf16.gmra.mrb[0].mxu0 %v82
  %v121 = vpop.f32.mrb[0].mxu0
  %v122 = vadd.f32 0.0, %v121
  %v123 = vpop.f32.mrb[0].mxu0
  %v124 = vadd.f32 0.0, %v123
  %v125 = vpop.f32.mrb[0].mxu0
  %v126 = vadd.f32 0.0, %v125
  %v127 = vpop.f32.mrb[0].mxu0
  %v128 = vadd.f32 0.0, %v127
  %129 = vmatprep.mubr.bf16.mxu0 0
  %130 = vmatmul.mubr.bf16.gmra.mrb[0].mxu0 %v85
  %v131 = vpop.f32.mrb[0].mxu0
  %v132 = vadd.f32 0.0, %v131
  %v133 = vpop.f32.mrb[0].mxu0
  %v134 = vadd.f32 0.0, %v133
  %v135 = vpop.f32.mrb[0].mxu0
  %v136 = vadd.f32 0.0, %v135
  %v137 = vpop.f32.mrb[0].mxu0
  %v138 = vadd.f32 0.0, %v137
  %139 = vdwg.mxu0
  %v140 = vld [vmem:[%s3] sm:$0x1]
  %v141 = vlaneseq
  %v142 = vshrl.u32 %v141, 7
  %v143 = vsub.s32 0, %v142
  %v144 = vrot.slane %v140, %v143
  %v145 = vadd.f32 %v122, %v144
  %v146 = vadd.f32 %v126, %v144
  %v147 = vadd.f32 %v132, %v144
  %v148 = vadd.f32 %v136, %v144
  %v149 = vpack.c.bf16 %v146, %v145
  %v150 = vpack.c.bf16 %v148, %v147
  %v151 = vld [vmem:[%s2] sm:$0xff]
  %v152 = vld [vmem:[%s2 + $0x8] sm:$0xf]
  %v153 = vld [vmem:[%s2 + $0xc] sm:$0xff]
  %v154 = vld [vmem:[%s2 + $0x14] sm:$0xf]
  %v155 = vld [vmem:[%s2 + $0x18] sm:$0xff]
  %v156 = vld [vmem:[%s2 + $0x20] sm:$0xf]
  %v157 = vld [vmem:[%s2 + $0x24] sm:$0xff]
  %v158 = vld [vmem:[%s2 + $0x2c] sm:$0xf]
  %v159 = vld [vmem:[%s2 + $0x30] sm:$0xff]
  %v160 = vld [vmem:[%s2 + $0x38] sm:$0xf]
  %v161 = vld [vmem:[%s2 + $0x3c] sm:$0xff]
  %v162 = vld [vmem:[%s2 + $0x44] sm:$0xf]
  %v163 = vld [vmem:[%s2 + $0x48] sm:$0xff]
  %v164 = vld [vmem:[%s2 + $0x50] sm:$0xf]
  %v165 = vld [vmem:[%s2 + $0x54] sm:$0xff]
  %v166 = vld [vmem:[%s2 + $0x5c] sm:$0xf]
  %v167 = vld [vmem:[%s2 + $0x60] sm:$0xff]
  %v168 = vld [vmem:[%s2 + $0x68] sm:$0xf]
  %v169 = vld [vmem:[%s2 + $0x6c] sm:$0xff]
  %v170 = vld [vmem:[%s2 + $0x74] sm:$0xf]
  %v171 = vld [vmem:[%s2 + $0x78] sm:$0xff]
  %v172 = vld [vmem:[%s2 + $0x80] sm:$0xf]
  %v173 = vld [vmem:[%s2 + $0x84] sm:$0xff]
  %v174 = vld [vmem:[%s2 + $0x8c] sm:$0xf]
  %v175 = vld [vmem:[%s2 + $0x90] sm:$0xff]
  %v176 = vld [vmem:[%s2 + $0x98] sm:$0xf]
  %v177 = vld [vmem:[%s2 + $0x9c] sm:$0xff]
  %v178 = vld [vmem:[%s2 + $0xa4] sm:$0xf]
  %v179 = vld [vmem:[%s2 + $0xa8] sm:$0xff]
  %v180 = vld [vmem:[%s2 + $0xb0] sm:$0xf]
  %v181 = vld [vmem:[%s2 + $0xb4] sm:$0xff]
  %v182 = vld [vmem:[%s2 + $0xbc] sm:$0xf]
  %v215 = vunpack.c.l.b16 %v151
  %v216 = vunpack.c.h.b16 %v151
  %v217 = vunpack.c.l.b16 %v152
  %v218 = vunpack.c.l.b16 %v153
  %v219 = vunpack.c.h.b16 %v153
  %v220 = vunpack.c.l.b16 %v154
  %v221 = vunpack.c.l.b16 %v155
  %v222 = vunpack.c.h.b16 %v155
  %v223 = vunpack.c.l.b16 %v156
  %v224 = vunpack.c.l.b16 %v157
  %v225 = vunpack.c.h.b16 %v157
  %v226 = vunpack.c.l.b16 %v158
  %v227 = vunpack.c.l.b16 %v159
  %v228 = vunpack.c.h.b16 %v159
  %v229 = vunpack.c.l.b16 %v160
  %v230 = vunpack.c.l.b16 %v161
  %v231 = vunpack.c.h.b16 %v161
  %v232 = vunpack.c.l.b16 %v162
  %v233 = vunpack.c.l.b16 %v163
  %v234 = vunpack.c.h.b16 %v163
  %v235 = vunpack.c.l.b16 %v164
  %v236 = vunpack.c.l.b16 %v165
  %v237 = vunpack.c.h.b16 %v165
  %v238 = vunpack.c.l.b16 %v166
  %v239 = vunpack.c.l.b16 %v167
  %v240 = vunpack.c.h.b16 %v167
  %v241 = vunpack.c.l.b16 %v168
  %v242 = vunpack.c.l.b16 %v169
  %v243 = vunpack.c.h.b16 %v169
  %v244 = vunpack.c.l.b16 %v170
  %v245 = vunpack.c.l.b16 %v171
  %v246 = vunpack.c.h.b16 %v171
  %v247 = vunpack.c.l.b16 %v172
  %v248 = vunpack.c.l.b16 %v173
  %v249 = vunpack.c.h.b16 %v173
  %v250 = vunpack.c.l.b16 %v174
  %v251 = vunpack.c.l.b16 %v175
  %v252 = vunpack.c.h.b16 %v175
  %v253 = vunpack.c.l.b16 %v176
  %v254 = vunpack.c.l.b16 %v177
  %v255 = vunpack.c.h.b16 %v177
  %v256 = vunpack.c.l.b16 %v178
  %v257 = vunpack.c.l.b16 %v179
  %v258 = vunpack.c.h.b16 %v179
  %v259 = vunpack.c.l.b16 %v180
  %v260 = vunpack.c.l.b16 %v181
  %v261 = vunpack.c.h.b16 %v181
  %v262 = vunpack.c.l.b16 %v182
  %v263 = vpack.c.b16 %v218, %v215
  %v264 = vpack.c.b16 %v219, %v216
  %v265 = vpack.c.b16 %v220, %v217
  %v266 = vpack.c.b16 %v224, %v221
  %v267 = vpack.c.b16 %v225, %v222
  %v268 = vpack.c.b16 %v226, %v223
  %v269 = vpack.c.b16 %v230, %v227
  %v270 = vpack.c.b16 %v231, %v228
  %v271 = vpack.c.b16 %v232, %v229
  %v272 = vpack.c.b16 %v236, %v233
  %v273 = vpack.c.b16 %v237, %v234
  %v274 = vpack.c.b16 %v238, %v235
  %v275 = vpack.c.b16 %v242, %v239
  %v276 = vpack.c.b16 %v243, %v240
  %v277 = vpack.c.b16 %v244, %v241
  %v278 = vpack.c.b16 %v248, %v245
  %v279 = vpack.c.b16 %v249, %v246
  %v280 = vpack.c.b16 %v250, %v247
  %v281 = vpack.c.b16 %v254, %v251
  %v282 = vpack.c.b16 %v255, %v252
  %v283 = vpack.c.b16 %v256, %v253
  %v284 = vpack.c.b16 %v260, %v257
  %v285 = vpack.c.b16 %v261, %v258
  %v286 = vpack.c.b16 %v262, %v259
  %311 = vmatprep.subr.bf16.mxu0 %v264
  %312 = vmatpush1.bf16.msra.mxu0 %v263
  %313 = vmatprep.subr.bf16.mxu0 %v267
  %314 = vmatpush1.bf16.msra.mxu0 %v266
  %315 = vmatprep.subr.bf16.mxu0 %v270
  %316 = vmatpush1.bf16.msra.mxu0 %v269
  %317 = vmatprep.subr.bf16.mxu0 %v273
  %318 = vmatpush1.bf16.msra.mxu0 %v272
  %319 = vmatprep.subr.bf16.mxu0 %v276
  %320 = vmatpush1.bf16.msra.mxu0 %v275
  %321 = vmatprep.subr.bf16.mxu0 %v279
  %322 = vmatpush1.bf16.msra.mxu0 %v278
  %323 = vmatprep.subr.bf16.mxu0 %v282
  %324 = vmatpush1.bf16.msra.mxu0 %v281
  %325 = vmatprep.subr.bf16.mxu0 %v285
  %326 = vmatpush1.bf16.msra.mxu0 %v284
  %327 = vmatprep.subr.bf16.mxu0 0
  %328 = vmatpush1.bf16.msra.mxu0 0
  %329 = vmatprep.subr.bf16.mxu0 0
  %330 = vmatpush1.bf16.msra.mxu0 0
  %331 = vmatprep.subr.bf16.mxu0 0
  %332 = vmatpush1.bf16.msra.mxu0 0
  %333 = vmatprep.subr.bf16.mxu0 0
  %334 = vmatpush1.bf16.msra.mxu0 0
  %335 = vmatprep.subr.bf16.mxu0 0
  %336 = vmatpush1.bf16.msra.mxu0 0
  %337 = vmatprep.subr.bf16.mxu0 0
  %338 = vmatpush1.bf16.msra.mxu0 0
  %339 = vmatprep.subr.bf16.mxu0 0
  %340 = vmatpush1.bf16.msra.mxu0 0
  %341 = vmatprep.subr.bf16.mxu0 0
  %342 = vmatpush1.bf16.msra.mxu0 0
  %343 = vmatprep.mubr.bf16.mxu0 0
  %344 = vmatmul.mubr.bf16.gmra.mrb[0].mxu0 %v149
  %v345 = vpop.f32.mrb[0].mxu0
  %v346 = vadd.f32 0.0, %v345
  %v347 = vpop.f32.mrb[0].mxu0
  %v348 = vadd.f32 0.0, %v347
  %v349 = vpop.f32.mrb[0].mxu0
  %v350 = vadd.f32 0.0, %v349
  %v351 = vpop.f32.mrb[0].mxu0
  %v352 = vadd.f32 0.0, %v351
  %353 = vmatprep.mubr.bf16.mxu0 0
  %354 = vmatmul.mubr.bf16.gmra.mrb[0].mxu0 %v150
  %v355 = vpop.f32.mrb[0].mxu0
  %v356 = vadd.f32 0.0, %v355
  %v357 = vpop.f32.mrb[0].mxu0
  %v358 = vadd.f32 0.0, %v357
  %v359 = vpop.f32.mrb[0].mxu0
  %v360 = vadd.f32 0.0, %v359
  %v361 = vpop.f32.mrb[0].mxu0
  %v362 = vadd.f32 0.0, %v361
  %363 = vdwg.mxu0
  %364 = vmatprep.subr.bf16.mxu0 0
  %365 = vmatpush1.bf16.msra.mxu0 %v265
  %366 = vmatprep.subr.bf16.mxu0 0
  %367 = vmatpush1.bf16.msra.mxu0 %v268
  %368 = vmatprep.subr.bf16.mxu0 0
  %369 = vmatpush1.bf16.msra.mxu0 %v271
  %370 = vmatprep.subr.bf16.mxu0 0
  %371 = vmatpush1.bf16.msra.mxu0 %v274
  %372 = vmatprep.subr.bf16.mxu0 0
  %373 = vmatpush1.bf16.msra.mxu0 %v277
  %374 = vmatprep.subr.bf16.mxu0 0
  %375 = vmatpush1.bf16.msra.mxu0 %v280
  %376 = vmatprep.subr.bf16.mxu0 0
  %377 = vmatpush1.bf16.msra.mxu0 %v283
  %378 = vmatprep.subr.bf16.mxu0 0
  %379 = vmatpush1.bf16.msra.mxu0 %v286
  %380 = vmatprep.subr.bf16.mxu0 0
  %381 = vmatpush1.bf16.msra.mxu0 0
  %382 = vmatprep.subr.bf16.mxu0 0
  %383 = vmatpush1.bf16.msra.mxu0 0
  %384 = vmatprep.subr.bf16.mxu0 0
  %385 = vmatpush1.bf16.msra.mxu0 0
  %386 = vmatprep.subr.bf16.mxu0 0
  %387 = vmatpush1.bf16.msra.mxu0 0
  %388 = vmatprep.subr.bf16.mxu0 0
  %389 = vmatpush1.bf16.msra.mxu0 0
  %390 = vmatprep.subr.bf16.mxu0 0
  %391 = vmatpush1.bf16.msra.mxu0 0
  %392 = vmatprep.subr.bf16.mxu0 0
  %393 = vmatpush1.bf16.msra.mxu0 0
  %394 = vmatprep.subr.bf16.mxu0 0
  %395 = vmatpush1.bf16.msra.mxu0 0
  %396 = vmatprep.mubr.bf16.mxu0 0
  %397 = vmatmul.mubr.bf16.gmra.mrb[0].mxu0 %v149
  %v398 = vpop.f32.mrb[0].mxu0
  %v399 = vadd.f32 0.0, %v398
  %v400 = vpop.f32.mrb[0].mxu0
  %v401 = vpop.f32.mrb[0].mxu0
  %v402 = vadd.f32 0.0, %v401
  %v403 = vpop.f32.mrb[0].mxu0
  %404 = vmatprep.mubr.bf16.mxu0 0
  %405 = vmatmul.mubr.bf16.gmra.mrb[0].mxu0 %v150
  %v406 = vpop.f32.mrb[0].mxu0
  %v407 = vadd.f32 0.0, %v406
  %v408 = vpop.f32.mrb[0].mxu0
  %v409 = vpop.f32.mrb[0].mxu0
  %v410 = vadd.f32 0.0, %v409
  %v411 = vpop.f32.mrb[0].mxu0
  %412 = vdwg.mxu0
  %v413 = vlaneseq
  %v414 = vshrl.u32 %v413, 7
  %v415 = vadd.s32 %v414, 8
  %v416 = vadd.s32 %v414, 16
  %v417 = vadd.s32 %v414, 24
  %vm418 = vcmp.lt.s32.totalorder %v414, 0
  %v419 = vsub.s32 0, %v414
  %v420 = vsel %vm418, %v419, %v414
  %v421 = vshrl.u32 %v420, 4
  %v422 = vand.u32 %v420, 15
  %v423 = vsub.s32 0, %v422
  %v424 = vsel %vm418, %v423, %v422
  %vm425 = vcmp.lt.s32.totalorder %v415, 0
  %v426 = vsub.s32 0, %v415
  %v427 = vsel %vm425, %v426, %v415
  %v428 = vshrl.u32 %v427, 4
  %v429 = vand.u32 %v427, 15
  %v430 = vsub.s32 0, %v429
  %v431 = vsel %vm425, %v430, %v429
  %vm432 = vcmp.lt.s32.totalorder %v416, 0
  %v433 = vsub.s32 0, %v416
  %v434 = vsel %vm432, %v433, %v416
  %v435 = vshrl.u32 %v434, 4
  %v436 = vand.u32 %v434, 15
  %v437 = vsub.s32 0, %v436
  %v438 = vsel %vm432, %v437, %v436
  %vm439 = vcmp.lt.s32.totalorder %v417, 0
  %v440 = vsub.s32 0, %v417
  %v441 = vsel %vm439, %v440, %v417
  %v442 = vshrl.u32 %v441, 4
  %v443 = vand.u32 %v441, 15
  %v444 = vsub.s32 0, %v443
  %v445 = vsel %vm439, %v444, %v443
  %vm446 = vcmp.ne.s32.totalorder %v424, 0
  %vm447 = vcmp.ne.s32.totalorder %v431, 0
  %vm448 = vcmp.ne.s32.totalorder %v438, 0
  %vm449 = vcmp.ne.s32.totalorder %v445, 0
  %vm450 = vcmp.lt.s32.totalorder %v424, 0
  %vm451 = vcmp.lt.s32.totalorder %v431, 0
  %vm452 = vcmp.lt.s32.totalorder %v438, 0
  %vm453 = vcmp.lt.s32.totalorder %v445, 0
  %vm454 = vmand %vm450, %vm446
  %vm455 = vmand %vm451, %vm447
  %vm456 = vmand %vm452, %vm448
  %vm457 = vmand %vm453, %vm449
  %v458 = vadd.s32 %v424, 16
  %v459 = vadd.s32 %v431, 16
  %v460 = vadd.s32 %v438, 16
  %v461 = vadd.s32 %v445, 16
  %v462 = vsel %vm454, %v458, %v424
  %v463 = vsel %vm455, %v459, %v431
  %v464 = vsel %vm456, %v460, %v438
  %v465 = vsel %vm457, %v461, %v445
  %vm466 = vcmp.ne.s32.totalorder %v462, 0
  %vm467 = vcmp.ne.s32.totalorder %v463, 0
  %vm468 = vcmp.ne.s32.totalorder %v464, 0
  %vm469 = vcmp.ne.s32.totalorder %v465, 0
  %v470 = vrot.slane %v346, 7
  %v471 = vrot.slane %v350, 7
  %v472 = vrot.slane %v356, 7
  %v473 = vrot.slane %v360, 7
  %vm474 = vcmp.lt.s32.totalorder %v414, 1
  %v475 = vsel %vm474, %v472, %v473
  %v476 = vsel %vm474, %v471, %v472
  %v477 = vsel %vm474, %v470, %v471
  %v478 = vsel %vm474, %v473, %v470
  %v479 = vsel %vm466, %v478, 0.0
  %v480 = vsel %vm467, %v477, 0.0
  %v481 = vsel %vm468, %v476, 0.0
  %v482 = vsel %vm469, %v475, 0.0
  %vm483 = vcmp.ne.s32.totalorder %v462, 15
  %vm484 = vcmp.ne.s32.totalorder %v463, 15
  %vm485 = vcmp.ne.s32.totalorder %v464, 15
  %vm486 = vcmp.ne.s32.totalorder %v465, 15
  %v487 = vrot.slane %v399, 1
  %v488 = vrot.slane %v402, 1
  %v489 = vrot.slane %v407, 1
  %v490 = vrot.slane %v410, 1
  %vm491 = vcmp.lt.s32.totalorder %v414, 7
  %v492 = vsel %vm491, %v489, %v490
  %v493 = vsel %vm491, %v488, %v489
  %v494 = vsel %vm491, %v487, %v488
  %v495 = vsel %vm491, %v490, %v487
  %v496 = vsel %vm483, %v494, 0.0
  %v497 = vsel %vm484, %v493, 0.0
  %v498 = vsel %vm485, %v492, 0.0
  %v499 = vsel %vm486, %v495, 0.0
  %v500 = vadd.f32 %v348, %v479
  %v501 = vadd.f32 %v352, %v480
  %v502 = vadd.f32 %v358, %v481
  %v503 = vadd.f32 %v362, %v482
  %v504 = vadd.f32 %v500, %v496
  %v505 = vadd.f32 %v501, %v497
  %v506 = vadd.f32 %v502, %v498
  %v507 = vadd.f32 %v503, %v499
  %v508 = vadd.f32 %v504, %v124
  %v509 = vadd.f32 %v505, %v128
  %v510 = vadd.f32 %v506, %v134
  %v511 = vadd.f32 %v507, %v138
  %v512 = vld [vmem:[%s3 + $0x1] sm:$0x1]
  %v513 = vlaneseq
  %v514 = vshrl.u32 %v513, 7
  %v515 = vsub.s32 0, %v514
  %v516 = vrot.slane %v512, %v515
  %v517 = vadd.f32 %v508, %v516
  %v518 = vadd.f32 %v509, %v516
  %v519 = vadd.f32 %v510, %v516
  %v520 = vadd.f32 %v511, %v516
  %v521 = vmax.f32 %v517, 0.0
  %v522 = vmax.f32 %v518, 0.0
  %v523 = vmax.f32 %v519, 0.0
  %v524 = vmax.f32 %v520, 0.0
  %525 = vst [vmem:[%s4] sm:$0xff] %v521
  %526 = vst [vmem:[%s4 + $0x8] sm:$0xff] %v522
  %527 = vst [vmem:[%s4 + $0x10] sm:$0xff] %v523
  %528 = vst [vmem:[%s4 + $0x18] sm:$0xff] %v524
  // Predicated region
  $region18: #{stgcn_block_forward.1} parent=0 // pred_check
    _
  $region19: #{stgcn_block_forward.1} parent=0 // pred_check_branch
    %530 = sbr.rel (0) target = $region21
  $region20: #{stgcn_block_forward.1} parent=0 // pred_region
    _
  $region21: #{stgcn_block_forward.1} parent=0 // pred_fallthru
    _
  // Predicated region
  $region22: #{stgcn_block_forward.1} parent=0 // pred_check
    _
  $region23: #{stgcn_block_forward.1} parent=0 // pred_check_branch
    %532 = sbr.rel (0) target = $region25
  $region24: #{stgcn_block_forward.1} parent=0 // pred_region
    _
  $region25: #{stgcn_block_forward.1} parent=0 // pred_fallthru
    _

</llo_original>
